<compile_context>
chip_gen: v7x
topology: tpu7x:2x2x1
jax: 0.10.0
libtpu: 0.0.40
codegen_flags: <defaults>
</compile_context>

<pallas_src>
import functools

import jax
import jax.numpy as jnp
from jax.experimental import pallas as pl
from jax.experimental.pallas import tpu as pltpu


def temporal_att_kernel(x_ref, w_ref, b_ref, o_ref, acc_ref, *, inv_hw):
    """Grid = (N // TN, HW // THW); grid axis 1 is the spatial reduction.

    x_ref:   (TN, C, THW) input tile (native dtype)
    w_ref:   (1, C)       conv center tap * BN scale (f32, VMEM)
    b_ref:   (1,)         folded conv bias + BN shift (f32, SMEM)
    o_ref:   (TN, C)      output tile (same block for every reduction step)
    acc_ref: (TN, C)      f32 VMEM scratch (partial spatial sums)
    """
    k = pl.program_id(1)

    @pl.when(k == 0)
    def _():
        acc_ref[...] = jnp.zeros_like(acc_ref)

    # Partial global-average-pool: accumulate this spatial chunk in f32.
    x = x_ref[...].astype(jnp.float32)                     # (TN, C, THW)
    acc_ref[...] += jnp.sum(x, axis=-1)                    # (TN, C)

    @pl.when(k == pl.num_programs(1) - 1)
    def _():
        pooled = acc_ref[...] * inv_hw                     # mean over H*W
        # 3x3 conv (pad=1) on a 1x1 zero-padded map == dot with the center
        # tap; eval-mode BatchNorm2d(1) folded into (w_eff, b_eff).
        logit = jnp.sum(pooled * w_ref[...], axis=-1, keepdims=True) + b_ref[0]
        att = jax.nn.sigmoid(logit)                        # (TN, 1)
        o_ref[...] = (pooled * att).astype(o_ref.dtype)    # broadcast over C


def _device_kind():
    try:
        return jax.devices()[0].device_kind.lower()
    except Exception:  # pragma: no cover - defensive
        return ""


def _budgets():
    """(per_buffer_budget_bytes, vmem_limit_cap_bytes) per TPU generation."""
    kind = _device_kind()
    if "v7" in kind:                 # 64 MiB physical VMEM
        return 14 << 20, 48 << 20
    if "v6" in kind:                 # 128 MiB physical VMEM
        return 10 << 20, 96 << 20
    if "v5" in kind:                 # 128 MiB physical, ~0.82 TB/s HBM
        return 5 << 20, 96 << 20
    return 8 << 20, 48 << 20         # conservative default


def _pick_tiles(N, C, HW, itemsize, per_buffer_budget, tile_n=None, tile_hw=None):
    """Pick (TN, THW) obeying the (8,128) layout rule and the VMEM budget.

    Preference order:
      1) Contiguous N-major tiles (THW = full HW), TN the largest sublane-aligned
         divisor of N that fits the budget, capped so grid[0] >= 2 when N allows.
      2) If one sublane-group of full rows is already over budget, keep TN small
         and split HW into multiples of 128.
      3) If HW cannot be split (HW % 128 != 0), take the full block; the wrapper
         raises vmem_limit_bytes to the computed need.
    """
    # Packed-sublane friendly multiple for the (TN, C) output/accumulator block.
    pref_sub = {4: 8, 2: 16, 1: 32}.get(itemsize, 8)
    sub = pref_sub if N % pref_sub == 0 else 8
    row_bytes = C * HW * itemsize

    if tile_n is not None or tile_hw is not None:          # explicit override
        tn = tile_n if tile_n is not None else (N if N % 8 else min(N, 8))
        thw = tile_hw if tile_hw is not None else HW
        assert N % tn == 0 and (tn % 8 == 0 or tn == N)
        assert HW % thw == 0 and (thw % 128 == 0 or thw == HW)
        return tn, thw

    # 1) Contiguous N-major tiles (one contiguous HBM slab per DMA).
    if N % sub == 0 and sub * row_bytes <= per_buffer_budget:
        max_rows = per_buffer_budget // row_bytes
        # Keep >= 2 N-tiles when possible so the "parallel" axis can shard
        # across v7x's two TensorCores.
        cap = N // 2 if N >= 2 * sub else N
        tn = sub
        m = 2 * sub
        limit = min(max_rows, cap)
        while m <= limit:
            if N % m == 0:
                tn = m
            m += sub
        return tn, HW

    # 2) One sublane-group of full rows is too big (or N not sublane-aligned):
    #    keep the N tile minimal and split HW instead.
    tn = sub if N % sub == 0 else N
    if HW % 128 == 0:
        max_hw = max(128, per_buffer_budget // max(1, tn * C * itemsize))
        thw = 128
        t = (max_hw // 128) * 128
        while t >= 128:
            if HW % t == 0:
                thw = t
                break
            t -= 128
        return tn, thw

    # 3) HW not splittable cleanly: full block; wrapper raises vmem_limit_bytes.
    return tn, HW


def temporal_attention_block(x_nchw, conv_w, conv_b, bn_gamma, bn_beta,
                             bn_mean, bn_var, b, t, eps=1e-5,
                             tile_n=None, tile_hw=None):
    N, C, H, W = x_nchw.shape
    assert N == b * t
    HW = H * W

    # Only the kernel center of the 3x3 conv touches a 1x1 zero-padded input.
    # Fold eval-mode BatchNorm2d(1) into an affine transform of the conv logit.
    a = bn_gamma[0] / jnp.sqrt(bn_var[0] + eps)
    w_eff = (conv_w[0, :, 1, 1] * a).reshape(1, C).astype(jnp.float32)   # (1, C)
    b_eff = jnp.asarray([conv_b[0] * a + bn_beta[0] - bn_mean[0] * a],
                        dtype=jnp.float32)                               # (1,)

    # Keep native dtype through the DMA (no wrapper f32 upcast); the (N, C, HW)
    # reshape of an NCHW tensor is free (contiguous view).
    # NOTE: if an upstream producer hands over NHWC, consume (N, HW, C) and
    # reduce axis=1 instead — here the PyTorch spec is NCHW, so keep (N, C, HW).
    x3 = x_nchw.reshape(N, C, HW)
    itemsize = x3.dtype.itemsize
    budget, vmem_cap = _budgets()
    tn, thw = _pick_tiles(N, C, HW, itemsize, budget, tile_n, tile_hw)
    grid = (N // tn, HW // thw)

    # Explicit VMEM limit derived from the actual tiles (double-buffered input
    # and output, broadcast weight, f32 accumulator, 2 MiB margin).
    in_tile_bytes = tn * C * thw * itemsize
    out_tile_bytes = tn * C * itemsize
    w_bytes = C * 4
    scratch_bytes = tn * C * 4
    need = 2 * in_tile_bytes + 2 * out_tile_bytes + 2 * w_bytes + scratch_bytes \
        + (2 << 20)
    vmem_limit = int(min(max(need, 16 << 20), vmem_cap))

    kernel = functools.partial(temporal_att_kernel, inv_hw=1.0 / float(HW))

    cost = pl.CostEstimate(
        flops=int(2 * N * C * HW),
        transcendentals=int(N),
        bytes_accessed=int(N * C * HW * itemsize + N * C * itemsize),
    )

    out = pl.pallas_call(
        kernel,
        out_shape=jax.ShapeDtypeStruct((N, C), x3.dtype),
        grid=grid,
        in_specs=[
            pl.BlockSpec((tn, C, thw), lambda i, k: (i, 0, k)),   # x tile
            pl.BlockSpec((1, C), lambda i, k: (0, 0)),            # folded weight
            pl.BlockSpec(memory_space=pltpu.MemorySpace.SMEM),    # folded bias
        ],
        out_specs=pl.BlockSpec((tn, C), lambda i, k: (i, 0)),     # same block ∀ k
        scratch_shapes=[pltpu.VMEM((tn, C), jnp.float32)],
        compiler_params=pltpu.CompilerParams(
            dimension_semantics=("parallel", "arbitrary"),
            vmem_limit_bytes=vmem_limit),
        cost_estimate=cost,
    )(x3, w_eff, b_eff)
    return out.reshape(b, t, C)


def reference(x_nchw, conv_w, conv_b, bn_gamma, bn_beta, bn_mean, bn_var,
              b, t, eps=1e-5):
    N, C, H, W = x_nchw.shape
    pooled = jnp.mean(x_nchw.astype(jnp.float32), axis=(2, 3))    # (N, C)
    logit = pooled @ conv_w[0, :, 1, 1] + conv_b[0]               # (N,)
    bn = (logit - bn_mean[0]) / jnp.sqrt(bn_var[0] + eps) * bn_gamma[0] + bn_beta[0]
    att = jax.nn.sigmoid(bn)[:, None]                             # (N, 1)
    return (pooled * att).reshape(b, t, C)


if __name__ == "__main__":
    def run_case(b, t, feat_dim, H, W, tile_n=None, tile_hw=None, seed=0):
        N = b * t
        key = jax.random.PRNGKey(seed)
        kx, kw, kb = jax.random.split(key, 3)
        x = jax.random.normal(kx, (N, feat_dim, H, W), dtype=jnp.float32)
        # Conv2d(feat_dim, 1, [3,3], padding=1) parameters (synthetic init)
        conv_w = jax.random.normal(kw, (1, feat_dim, 3, 3), dtype=jnp.float32) * 0.2
        conv_b = jax.random.normal(kb, (1,), dtype=jnp.float32) * 0.1
        # BatchNorm2d(1) eval-mode parameters / running stats
        bn_gamma = jnp.asarray([1.3], dtype=jnp.float32)
        bn_beta = jnp.asarray([0.2], dtype=jnp.float32)
        bn_mean = jnp.asarray([0.05], dtype=jnp.float32)
        bn_var = jnp.asarray([0.9], dtype=jnp.float32)

        out = temporal_attention_block(x, conv_w, conv_b, bn_gamma, bn_beta,
                                       bn_mean, bn_var, b, t,
                                       tile_n=tile_n, tile_hw=tile_hw)
        out = jax.block_until_ready(out)
        ref = reference(x, conv_w, conv_b, bn_gamma, bn_beta, bn_mean, bn_var, b, t)
        assert out.shape == (b, t, feat_dim)
        assert jnp.allclose(out, ref, atol=1e-4, rtol=1e-4), \
            float(jnp.max(jnp.abs(out - ref)))

    # Small case matching the module's typical use (auto tiling, single step).
    run_case(b=2, t=4, feat_dim=8, H=16, W=16)
    # Lane-dense channels + forced multi-step HW reduction grid to exercise the
    # accumulator / pipelined path (grid = (1, 4)).
    run_case(b=2, t=4, feat_dim=128, H=32, W=32, tile_hw=256, seed=1)
    # N large enough to split into >= 2 parallel N-major contiguous tiles
    # (grid = (2, 1)), exercising the preferred contiguous-slab path.
    run_case(b=4, t=8, feat_dim=16, H=16, W=8, seed=2)

    print("KERNEL_OK")
</pallas_src>

<mosaic_0001>
module attributes {stable_mosaic.version = 11 : i64} {
  func.func @temporal_att_kernel(%arg0: i32, %arg1: i32, %arg2: memref<8x8x256xf32, #tpu.memory_space<vmem>>, %arg3: memref<1x8xf32, #tpu.memory_space<vmem>>, %arg4: memref<1xf32, #tpu.memory_space<smem>>, %arg5: memref<8x8xf32, #tpu.memory_space<vmem>>, %arg6: memref<8x8xf32, #tpu.memory_space<vmem>>) attributes {dimension_semantics = [#tpu.dimension_semantics<parallel>, #tpu.dimension_semantics<arbitrary>], iteration_bounds = array<i64: 1, 1>, scalar_prefetch = 0 : i64, scratch_operands = 1 : i64, tpu.core_type = #tpu.core_type<tc>, window_params = [{transform_indices = @transform_0, window_bounds = array<i64: 8, 8, 256>}, {pipeline_mode = #tpu.pipeline_mode<synchronous>, transform_indices = @transform_1, window_bounds = array<i64: 1, 8>}, {transform_indices = @transform_2, window_bounds = array<i64: 1>}, {transform_indices = @transform_3, window_bounds = array<i64: 8, 8>}]} {
    %c0_i32 = arith.constant 0 : i32
    %0 = arith.cmpi eq, %arg1, %c0_i32 : i32
    %1 = arith.extui %0 : i1 to i32
    %c0_i32_0 = arith.constant 0 : i32
    %2 = arith.cmpi ne, %1, %c0_i32_0 : i32
    scf.if %2 {
      %cst_9 = arith.constant 0.000000e+00 : f32
      %11 = vector.broadcast %cst_9 : f32 to vector<8x8xf32>
      %c0_10 = arith.constant 0 : index
      %c0_11 = arith.constant 0 : index
      %12 = vector.load %arg6[%c0_10, %c0_11] : memref<8x8xf32, #tpu.memory_space<vmem>>, vector<8x8xf32>
      tpu.vector_store %arg6[%c0_10, %c0_11], %11 {strides = array<i32>} : memref<8x8xf32, #tpu.memory_space<vmem>>, vector<8x8xf32>,
    } else {
    }
    %c0 = arith.constant 0 : index
    %c0_1 = arith.constant 0 : index
    %c0_2 = arith.constant 0 : index
    %3 = vector.load %arg2[%c0, %c0_1, %c0_2] : memref<8x8x256xf32, #tpu.memory_space<vmem>>, vector<8x8x256xf32>
    %c0_3 = arith.constant 0 : index
    %c0_4 = arith.constant 0 : index
    %4 = vector.load %arg6[%c0_3, %c0_4] : memref<8x8xf32, #tpu.memory_space<vmem>>, vector<8x8xf32>
    %cst = arith.constant dense<0.000000e+00> : vector<8x8xf32>
    %5 = vector.multi_reduction <add>, %3, %cst [2] : vector<8x8x256xf32> to vector<8x8xf32>
    %6 = arith.addf %4, %5 : vector<8x8xf32>
    %c0_5 = arith.constant 0 : index
    %c0_6 = arith.constant 0 : index
    %7 = vector.load %arg6[%c0_5, %c0_6] : memref<8x8xf32, #tpu.memory_space<vmem>>, vector<8x8xf32>
    tpu.vector_store %arg6[%c0_5, %c0_6], %6 {strides = array<i32>} : memref<8x8xf32, #tpu.memory_space<vmem>>, vector<8x8xf32>,
    %c0_i32_7 = arith.constant 0 : i32
    %8 = arith.cmpi eq, %arg1, %c0_i32_7 : i32
    %9 = arith.extui %8 : i1 to i32
    %c0_i32_8 = arith.constant 0 : i32
    %10 = arith.cmpi ne, %9, %c0_i32_8 : i32
    scf.if %10 {
      %c0_9 = arith.constant 0 : index
      %c0_10 = arith.constant 0 : index
      %11 = vector.load %arg6[%c0_9, %c0_10] : memref<8x8xf32, #tpu.memory_space<vmem>>, vector<8x8xf32>
      %cst_11 = arith.constant 3.906250e-03 : f32
      %12 = vector.broadcast %cst_11 : f32 to vector<8x8xf32>
      %13 = arith.mulf %11, %12 : vector<8x8xf32>
      %c0_12 = arith.constant 0 : index
      %c0_13 = arith.constant 0 : index
      %14 = vector.load %arg3[%c0_12, %c0_13] : memref<1x8xf32, #tpu.memory_space<vmem>>, vector<1x8xf32>
      %15 = vector.broadcast %14 : vector<1x8xf32> to vector<8x8xf32>
      %16 = arith.mulf %13, %15 : vector<8x8xf32>
      %cst_14 = arith.constant dense<0.000000e+00> : vector<8xf32>
      %17 = vector.multi_reduction <add>, %16, %cst_14 [1] : vector<8x8xf32> to vector<8xf32>
      %18 = vector.shape_cast %17 : vector<8xf32> to vector<8x1xf32>
      %c0_15 = arith.constant 0 : index
      %19 = memref.load %arg4[%c0_15] : memref<1xf32, #tpu.memory_space<smem>>
      %20 = vector.broadcast %19 : f32 to vector<8x1xf32>
      %21 = arith.addf %18, %20 : vector<8x1xf32>
      %22 = arith.negf %21 : vector<8x1xf32>
      %23 = math.exp %22 : vector<8x1xf32>
      %cst_16 = arith.constant 1.000000e+00 : f32
      %24 = vector.broadcast %cst_16 : f32 to vector<8x1xf32>
      %25 = arith.addf %24, %23 : vector<8x1xf32>
      %26 = arith.divf %24, %25 : vector<8x1xf32>
      %27 = vector.broadcast %26 : vector<8x1xf32> to vector<8x8xf32>
      %28 = arith.mulf %13, %27 : vector<8x8xf32>
      %c0_17 = arith.constant 0 : index
      %c0_18 = arith.constant 0 : index
      %29 = vector.load %arg5[%c0_17, %c0_18] : memref<8x8xf32, #tpu.memory_space<vmem>>, vector<8x8xf32>
      tpu.vector_store %arg5[%c0_17, %c0_18], %28 {strides = array<i32>} : memref<8x8xf32, #tpu.memory_space<vmem>>, vector<8x8xf32>,
    } else {
    }
    return
  }
  func.func @transform_0(%arg0: i32, %arg1: i32) -> (i32, i32, i32) {
    %c0_i32 = arith.constant 0 : i32
    %c0_i32_0 = arith.constant 0 : i32
    return %arg0, %c0_i32, %arg1 : i32, i32, i32
  }
  func.func @transform_1(%arg0: i32, %arg1: i32) -> (i32, i32) {
    %c0_i32 = arith.constant 0 : i32
    %c0_i32_0 = arith.constant 0 : i32
    %c0_i32_1 = arith.constant 0 : i32
    return %c0_i32, %c0_i32_0 : i32, i32
  }
  func.func @transform_2(%arg0: i32, %arg1: i32) -> i32 {
    %c0_i32 = arith.constant 0 : i32
    %c0_i32_0 = arith.constant 0 : i32
    return %c0_i32 : i32
  }
  func.func @transform_3(%arg0: i32, %arg1: i32) -> (i32, i32) {
    %c0_i32 = arith.constant 0 : i32
    %c0_i32_0 = arith.constant 0 : i32
    return %arg0, %c0_i32 : i32, i32
  }
}

</mosaic_0001>

<llo_original>
// kernel: tpu_custom_call.1
$region0: #{tpu_custom_call.1}
  #allocation0 [shape = 'u32[]', space=smem, size = 0x4, offset = 0x4, fixed_abs, tag = 'smem constant byte address 0x4 - core index']
  #allocation1 [shape = 'u32[144,128]{1,0:T(1,128)}', space=vmem, size = 0x12000, scoped, tag = 'internal scratch']
  #allocation2 [shape = 'f32[8,8]{1,0:T(8,128)}', space=vmem, size = 0x1000, scoped, tag = 'scratch operand']
  #allocation3 [shape = 'f32[1]{0:T(128)S(6)}', space=smem, size = 0x200, scoped, tag = 'scoped memory for tpu_custom_call.1']
  %s0 = inlined_call_operand.hbm [shape: f32[8,8,256], index: 0, kind: input, shape index: {}]
  %s1 = inlined_call_operand.vmem [shape: f32[1,8], index: 1, kind: input, shape index: {}]
  %s2 = inlined_call_operand.<no memory space> [shape: f32[1], index: 2, kind: input, shape index: {}]
  %s3 = inlined_call_operand.hbm [shape: f32[8,8], index: 3, kind: output, shape index: {}]
  %s4 = sld [smem:[#allocation0]]
  $region34: #{tpu_custom_call.1} parent=0
    _
  %s6 = ssub.s32 1, %s4
  %s7 = scalar_select 0, %s6, %s4
  %8 = sst [smem:[#allocation3]] %s2
  $region1: #{tpu_custom_call.1} parent=0
    #allocation4 [shape = 'u8[65536]{0}', space=vmem, size = 0x10000, scoped, tag = 'input window, operand 0, single buffered']
    #allocation5 [shape = 's32[1]{0}', space=sflag, size = 0x4, scoped, tag = 'scoped memory for tpu_custom_call.1']
    #allocation6 [shape = 's32[1]{0}', space=sflag, size = 0x4, scoped, tag = 'scoped memory for tpu_custom_call.1']
    #allocation7 [shape = 'u8[4096]{0}', space=vmem, size = 0x1000, scoped, tag = 'output window, operand 0, single buffered']
    %9 = vsyncpa [#allocation5], 0
    %10 = vsyncpa [#allocation6], 0
    // Predicated region
    $region2: #{tpu_custom_call.1} parent=1 // pred_check
      _
    $region3: #{tpu_custom_call.1} parent=1 // pred_check_branch
      %12 = sbr.rel (0) target = $region5
    $region4: #{tpu_custom_call.1} parent=1 // pred_region
      %s14 = ssub.s32 2048, 2048
      %15 = vsyncadd [#allocation5], %s14
      %s16 = sshll.u32 [#allocation4], 4
      %s17 = int_to_ptr.vmem [resolvable:$true] %s16
      %22 = dma.hbm_to_vmem [thread:$0]  %s0, 2048, %s17, [#allocation5], 256, 256, 16
    $region5: #{tpu_custom_call.1} parent=1 // pred_fallthru
      _
    // Predicated region
    $region6: #{tpu_custom_call.1} parent=1 // pred_check
      _
    $region7: #{tpu_custom_call.1} parent=1 // pred_check_branch
      %24 = sbr.rel (0) target = $region9
    $region8: #{tpu_custom_call.1} parent=1 // pred_region
      _
    $region9: #{tpu_custom_call.1} parent=1 // pred_fallthru
      _
    // Predicated region
    $region10: #{tpu_custom_call.1} parent=1 // pred_check
      _
    $region11: #{tpu_custom_call.1} parent=1 // pred_check_branch
      %26 = sbr.rel (0) target = $region13
    $region12: #{tpu_custom_call.1} parent=1 // pred_region
      _
    $region13: #{tpu_custom_call.1} parent=1 // pred_fallthru
      _
    // Predicated region
    $region14: #{tpu_custom_call.1} parent=1 // pred_check
      _
    $region15: #{tpu_custom_call.1} parent=1 // pred_check_branch
      %28 = sbr.rel (0) target = $region17
    $region16: #{tpu_custom_call.1} parent=1 // pred_region
      %29 = dma.done [#allocation5], 2048
    $region17: #{tpu_custom_call.1} parent=1 // pred_fallthru
      _
    %p30 = scmp.eq.s32.totalorder 0, 0
    // Predicated region
    $region18: #{tpu_custom_call.1} parent=1 // pred_check
      %p31 = pneg %p30
    $region19: #{tpu_custom_call.1} parent=1 // pred_check_branch
      %33 = sbr.rel (%p31) target = $region21
    $region20: #{tpu_custom_call.1} parent=1 // pred_region
      %vm34 = vcmask 64512
      %35 = vst.msk [vmem:[#allocation2] sm:$0xff] %vm34, 0.0
    $region21: #{tpu_custom_call.1} parent=1 // pred_fallthru
      _
    %v36 = vld [vmem:[#allocation4] sm:$0xff]
    %v37 = vld [vmem:[#allocation4 + $0x8] sm:$0xff]
    %v38 = vld [vmem:[#allocation4 + $0x10] sm:$0xff]
    %v39 = vld [vmem:[#allocation4 + $0x18] sm:$0xff]
    %v40 = vld [vmem:[#allocation4 + $0x20] sm:$0xff]
    %v41 = vld [vmem:[#allocation4 + $0x28] sm:$0xff]
    %v42 = vld [vmem:[#allocation4 + $0x30] sm:$0xff]
    %v43 = vld [vmem:[#allocation4 + $0x38] sm:$0xff]
    %v44 = vld [vmem:[#allocation4 + $0x40] sm:$0xff]
    %v45 = vld [vmem:[#allocation4 + $0x48] sm:$0xff]
    %v46 = vld [vmem:[#allocation4 + $0x50] sm:$0xff]
    %v47 = vld [vmem:[#allocation4 + $0x58] sm:$0xff]
    %v48 = vld [vmem:[#allocation4 + $0x60] sm:$0xff]
    %v49 = vld [vmem:[#allocation4 + $0x68] sm:$0xff]
    %v50 = vld [vmem:[#allocation4 + $0x70] sm:$0xff]
    %v51 = vld [vmem:[#allocation4 + $0x78] sm:$0xff]
    %v52 = vld [vmem:[#allocation2] sm:$0xff]
    %v53 = vadd.f32 %v36, %v37
    %54 = vadd.xlane.f32.xlu0 %v53
    %v55 = vpop.xlane.xlu0 %54
    %v56 = vadd.f32 %v38, %v39
    %57 = vadd.xlane.f32.xlu0 %v56
    %v58 = vpop.xlane.xlu0 %57
    %v59 = vadd.f32 %v40, %v41
    %60 = vadd.xlane.f32.xlu0 %v59
    %v61 = vpop.xlane.xlu0 %60
    %v62 = vadd.f32 %v42, %v43
    %63 = vadd.xlane.f32.xlu0 %v62
    %v64 = vpop.xlane.xlu0 %63
    %v65 = vadd.f32 %v44, %v45
    %66 = vadd.xlane.f32.xlu0 %v65
    %v67 = vpop.xlane.xlu0 %66
    %v68 = vadd.f32 %v46, %v47
    %69 = vadd.xlane.f32.xlu0 %v68
    %v70 = vpop.xlane.xlu0 %69
    %v71 = vadd.f32 %v48, %v49
    %72 = vadd.xlane.f32.xlu0 %v71
    %v73 = vpop.xlane.xlu0 %72
    %v74 = vadd.f32 %v50, %v51
    %75 = vadd.xlane.f32.xlu0 %v74
    %v76 = vpop.xlane.xlu0 %75
    %v85 = vlaneseq
    %v86 = vand.u32 %v85, 127
    %v87 = vlaneseq
    %v88 = vshrl.u32 %v87, 7
    %v89 = vsub.s32 %v86, %v88
    %v90 = vrot.slane %v55, %v89
    %v91 = vlaneseq
    %v92 = vshrl.u32 %v91, 7
    %v93 = vsub.s32 %v86, %v92
    %v94 = vrot.slane %v58, %v93
    %v95 = vlaneseq
    %v96 = vshrl.u32 %v95, 7
    %v97 = vsub.s32 %v86, %v96
    %v98 = vrot.slane %v61, %v97
    %v99 = vlaneseq
    %v100 = vshrl.u32 %v99, 7
    %v101 = vsub.s32 %v86, %v100
    %v102 = vrot.slane %v64, %v101
    %v103 = vlaneseq
    %v104 = vshrl.u32 %v103, 7
    %v105 = vsub.s32 %v86, %v104
    %v106 = vrot.slane %v67, %v105
    %v107 = vlaneseq
    %v108 = vshrl.u32 %v107, 7
    %v109 = vsub.s32 %v86, %v108
    %v110 = vrot.slane %v70, %v109
    %v111 = vlaneseq
    %v112 = vshrl.u32 %v111, 7
    %v113 = vsub.s32 %v86, %v112
    %v114 = vrot.slane %v73, %v113
    %v115 = vlaneseq
    %v116 = vshrl.u32 %v115, 7
    %v117 = vsub.s32 %v86, %v116
    %v118 = vrot.slane %v76, %v117
    %vm119 = vcmask 1041409
    %v120 = vsel %vm119, %v94, %v90
    %vm121 = vcmask 1042434
    %v122 = vsel %vm121, %v98, %v120
    %vm123 = vcmask 1043459
    %v124 = vsel %vm123, %v102, %v122
    %vm125 = vcmask 1044484
    %v126 = vsel %vm125, %v106, %v124
    %vm127 = vcmask 1045509
    %v128 = vsel %vm127, %v110, %v126
    %vm129 = vcmask 1046534
    %v130 = vsel %vm129, %v114, %v128
    %vm131 = vcmask 1047559
    %v132 = vsel %vm131, %v118, %v130
    %v134 = vadd.f32 %v52, %v132
    %vm135 = vcmask 64512
    %136 = vst.msk [vmem:[#allocation2] sm:$0xff] %vm135, %v134
    // Predicated region
    $region22: #{tpu_custom_call.1} parent=1 // pred_check
      %p137 = pneg %p30
    $region23: #{tpu_custom_call.1} parent=1 // pred_check_branch
      %139 = sbr.rel (%p137) target = $region25
    $region24: #{tpu_custom_call.1} parent=1 // pred_region
      %v140 = vld [vmem:[#allocation2] sm:$0xff]
      %v141 = vmul.f32 %v140, 0.00390625
      %v142 = vld [vmem:[%s1] sm:$0x1]
      %v144 = vlaneseq
      %v145 = vshrl.u32 %v144, 7
      %v146 = vsub.s32 0, %v145
      %v147 = vrot.slane %v142, %v146
      %v149 = vmul.f32 %v141, %v147
      %v150 = vsel %vm135, %v149, 0.0
      %151 = vadd.xlane.f32.xlu0 %v150
      %v152 = vpop.xlane.xlu0 %151
      %s153 = sld [smem:[#allocation3]]
      %v154 = vstv %s153
      %v155 = vadd.f32 %v152, %v154
      %v156 = vxor.u32 %v155, 2147483648
      %v157 = vmul.f32 %v156, 1.442695
      %v158 = vpow.pop %v157
      %v159 = vadd.f32 %v158, 1.0
      %v160 = vrcp.pop %v159
      %v161 = vmul.f32 1.0, %v160
      %v162 = vmul.f32 %v141, %v161
      %163 = vst.msk [vmem:[#allocation7] sm:$0xff] %vm135, %v162
    $region25: #{tpu_custom_call.1} parent=1 // pred_fallthru
      _
    // Predicated region
    $region26: #{tpu_custom_call.1} parent=1 // pred_check
      _
    $region27: #{tpu_custom_call.1} parent=1 // pred_check_branch
      %165 = sbr.rel (0) target = $region29
    $region28: #{tpu_custom_call.1} parent=1 // pred_region
      %s167 = ssub.s32 128, 128
      %168 = vsyncadd [#allocation6], %s167
      %s170 = sshll.u32 [#allocation7], 4
      %s171 = int_to_ptr.vmem [resolvable:$true] %s170
      %173 = dma.vmem_to_hbm [thread:$0]  %s171, 128, %s3, [#allocation6]
    $region29: #{tpu_custom_call.1} parent=1 // pred_fallthru
      _
    // Predicated region
    $region30: #{tpu_custom_call.1} parent=1 // pred_check
      _
    $region31: #{tpu_custom_call.1} parent=1 // pred_check_branch
      %175 = sbr.rel (0) target = $region33
    $region32: #{tpu_custom_call.1} parent=1 // pred_region
      %176 = dma.done [#allocation6], 128
    $region33: #{tpu_custom_call.1} parent=1 // pred_fallthru
      _
    %177 = vsyncpa [#allocation5], 1
    %178 = vsyncpa [#allocation6], 1

</llo_original>
